<compile_context>
chip_gen: v5e
topology: v5e:2x2
jax: 0.10.0
libtpu: 0.0.40
codegen_flags: <defaults>
</compile_context>

<pallas_src>
import jax
import jax.numpy as jnp
from jax.experimental import pallas as pl
from jax.experimental.pallas import tpu as pltpu

_TARGET_BLOCK_BYTES = 8 * 1024 * 1024   # per-buffer block, in actual bytes
_VMEM_LIMIT_BYTES = 48 * 1024 * 1024    # 2 bufs x (in + out) x 8 MiB + scratch


def _round_up(a: int, b: int) -> int:
    return -(-a // b) * b


def _silu_kernel(x_ref, o_ref):
    # Exact f32 sigmoid; the op is HBM-bound so compute-unit choice is free.
    x = x_ref[...].astype(jnp.float32)
    o_ref[...] = (x * jax.nn.sigmoid(x)).astype(o_ref.dtype)


def _silu_2d(x2d: jax.Array, *, block_bytes: int) -> jax.Array:
    rows, width = x2d.shape
    itemsize = jnp.dtype(x2d.dtype).itemsize
    # dtype-native sublane multiple: 8 for f32, 16 for bf16, 32 for int8/fp8.
    sublane = max(8, 32 // itemsize)

    # ~block_bytes per buffer in real element bytes (bf16 gets 2x the rows).
    max_tile = max(sublane,
                   (block_bytes // (width * itemsize)) // sublane * sublane)
    grid_n = pl.cdiv(rows, max_tile)
    # Keep the grid even when > 1 so v7x's two TensorCores get equal shares;
    # on single-TC chips this costs at most one extra ~0.35us pipeline step.
    if grid_n > 1 and grid_n % 2 == 1:
        grid_n += 1
    tile_rows = min(_round_up(pl.cdiv(rows, grid_n), sublane),
                    _round_up(rows, sublane))
    grid_n = pl.cdiv(rows, tile_rows)  # best effort; may drift after rounding

    return pl.pallas_call(
        _silu_kernel,
        out_shape=jax.ShapeDtypeStruct((rows, width), x2d.dtype),
        grid_spec=pltpu.PrefetchScalarGridSpec(
            num_scalar_prefetch=0,
            grid=(grid_n,),
            in_specs=[pl.BlockSpec((tile_rows, width), lambda i: (i, 0))],
            out_specs=pl.BlockSpec((tile_rows, width), lambda i: (i, 0)),
        ),
        compiler_params=pltpu.CompilerParams(
            dimension_semantics=("parallel",),
            vmem_limit_bytes=_VMEM_LIMIT_BYTES,
        ),
    )(x2d)


def silu_pallas(x: jax.Array, *, block_bytes: int = _TARGET_BLOCK_BYTES) -> jax.Array:
    """Element-wise SiLU, same shape & dtype as input (any rank)."""
    # TODO(synk): PyTorch's `inplace=True` has no JAX equivalent (immutable
    # arrays); the out-of-place result is numerically identical.
    orig_shape = x.shape
    n = x.size
    if n == 0:
        return x

    x_flat = jnp.ravel(x)

    # Widest lane-dense width (multiple of 128) that divides n.
    width = 0
    for w in (1024, 512, 256, 128):
        if n % w == 0:
            width = w
            break

    if width:
        out2d = _silu_2d(x_flat.reshape(n // width, width),
                         block_bytes=block_bytes)
        return out2d.reshape(orig_shape)

    # Rare ragged path: kernel on the bulk, plain XLA on the <128-elem tail.
    bulk = (n // 128) * 128
    tail = x_flat[bulk:].astype(jnp.float32)
    tail_out = (tail * jax.nn.sigmoid(tail)).astype(x.dtype)
    if bulk == 0:
        return tail_out.reshape(orig_shape)
    bulk_out = silu_pallas(x_flat[:bulk], block_bytes=block_bytes)
    return jnp.concatenate([bulk_out, tail_out]).reshape(orig_shape)


def _ref_silu(x):
    xf = x.astype(jnp.float32)
    return (xf * jax.nn.sigmoid(xf)).astype(x.dtype)


if __name__ == "__main__":
    key = jax.random.PRNGKey(0)
    k0, k1, k2, k3, k4 = jax.random.split(key, 5)

    # 1) NCHW f32 input, as the module would receive from a conv stack.
    x = jax.random.normal(k0, (2, 4, 16, 16), dtype=jnp.float32)
    y = silu_pallas(x)
    jax.block_until_ready(y)
    assert y.shape == x.shape and y.dtype == x.dtype
    assert jnp.allclose(y, _ref_silu(x), atol=1e-5, rtol=1e-5)

    # 2) bf16 input — exercises dtype-aware (16-sublane) block sizing.
    xb = jax.random.normal(k1, (2, 8, 32, 32), dtype=jnp.bfloat16)
    yb = silu_pallas(xb)
    jax.block_until_ready(yb)
    assert yb.shape == xb.shape and yb.dtype == xb.dtype
    assert jnp.allclose(yb.astype(jnp.float32),
                        _ref_silu(xb).astype(jnp.float32),
                        atol=2e-2, rtol=2e-2)

    # 3) Size not a multiple of 128 — exercises the bulk + tail ragged path.
    xr = jax.random.normal(k2, (3, 5, 7, 9), dtype=jnp.float32)
    yr = silu_pallas(xr)
    jax.block_until_ready(yr)
    assert yr.shape == xr.shape and yr.dtype == xr.dtype
    assert jnp.allclose(yr, _ref_silu(xr), atol=1e-5, rtol=1e-5)

    # 4) Tiny block size to exercise a multi-block (even) grid on small data.
    xg = jax.random.normal(k3, (2, 8, 32, 32), dtype=jnp.float32)
    yg = silu_pallas(xg, block_bytes=32 * 1024)
    jax.block_until_ready(yg)
    assert jnp.allclose(yg, _ref_silu(xg), atol=1e-5, rtol=1e-5)

    # 5) Multi-block grid with a ragged last (edge-masked) block.
    xe = jax.random.normal(k4, (2, 4, 24, 24), dtype=jnp.float32)
    ye = silu_pallas(xe, block_bytes=8 * 1024)
    jax.block_until_ready(ye)
    assert jnp.allclose(ye, _ref_silu(xe), atol=1e-5, rtol=1e-5)

    print("KERNEL_OK")
</pallas_src>

<mosaic_0001>
module attributes {stable_mosaic.version = 11 : i64} {
  func.func @_silu_kernel(%arg0: i32, %arg1: memref<8x1024xf32, #tpu.memory_space<vmem>>, %arg2: memref<8x1024xf32, #tpu.memory_space<vmem>>) attributes {dimension_semantics = [#tpu.dimension_semantics<parallel>], iteration_bounds = array<i64: 1>, scalar_prefetch = 0 : i64, scratch_operands = 0 : i64, tpu.core_type = #tpu.core_type<tc>, window_params = [{transform_indices = @transform_0, window_bounds = array<i64: 8, 1024>}, {transform_indices = @transform_1, window_bounds = array<i64: 8, 1024>}]} {
    %c0 = arith.constant 0 : index
    %c0_0 = arith.constant 0 : index
    %0 = vector.load %arg1[%c0, %c0_0] : memref<8x1024xf32, #tpu.memory_space<vmem>>, vector<8x1024xf32>
    %1 = arith.negf %0 : vector<8x1024xf32>
    %2 = math.exp %1 : vector<8x1024xf32>
    %cst = arith.constant 1.000000e+00 : f32
    %3 = vector.broadcast %cst : f32 to vector<8x1024xf32>
    %4 = arith.addf %3, %2 : vector<8x1024xf32>
    %5 = arith.divf %3, %4 : vector<8x1024xf32>
    %6 = arith.mulf %0, %5 : vector<8x1024xf32>
    %c0_1 = arith.constant 0 : index
    %c0_2 = arith.constant 0 : index
    %7 = vector.load %arg2[%c0_1, %c0_2] : memref<8x1024xf32, #tpu.memory_space<vmem>>, vector<8x1024xf32>
    tpu.vector_store %arg2[%c0_1, %c0_2], %6 {strides = array<i32>} : memref<8x1024xf32, #tpu.memory_space<vmem>>, vector<8x1024xf32>,
    return
  }
  func.func @transform_0(%arg0: i32) -> (i32, i32) {
    %c0_i32 = arith.constant 0 : i32
    %c0_i32_0 = arith.constant 0 : i32
    return %arg0, %c0_i32 : i32, i32
  }
  func.func @transform_1(%arg0: i32) -> (i32, i32) {
    %c0_i32 = arith.constant 0 : i32
    %c0_i32_0 = arith.constant 0 : i32
    return %arg0, %c0_i32 : i32, i32
  }
}

</mosaic_0001>

<llo_original>
// kernel: tpu_custom_call.1
$region0: #{tpu_custom_call.1}
  #allocation0 [shape = 'u32[]', space=smem, size = 0x4, offset = 0x4, fixed_abs, tag = 'smem constant byte address 0x4 - core index']
  #allocation1 [shape = 'u32[72,128]{1,0:T(1,128)}', space=vmem, size = 0x9000, scoped, tag = 'internal scratch']
  %s0 = inlined_call_operand.hbm [shape: f32[2,1024], index: 0, kind: input, shape index: {}]
  %s1 = inlined_call_operand.hbm [shape: f32[2,1024], index: 1, kind: output, shape index: {}]
  %s2 = sld [smem:[#allocation0]]
  $region18: #{tpu_custom_call.1} parent=0
    _
  %s4 = ssub.s32 1, %s2
  %s5 = scalar_select 0, %s4, %s2
  $region1: #{tpu_custom_call.1} parent=0
    #allocation2 [shape = 'u8[32768]{0}', space=vmem, size = 0x8000, scoped, tag = 'input window, operand 0, single buffered']
    #allocation3 [shape = 's32[1]{0}', space=sflag, size = 0x4, scoped, tag = 'scoped memory for tpu_custom_call.1']
    #allocation4 [shape = 's32[1]{0}', space=sflag, size = 0x4, scoped, tag = 'scoped memory for tpu_custom_call.1']
    #allocation5 [shape = 'u8[32768]{0}', space=vmem, size = 0x8000, scoped, tag = 'output window, operand 0, single buffered']
    %6 = vsyncpa [#allocation3], 0
    %7 = vsyncpa [#allocation4], 0
    // Predicated region
    $region2: #{tpu_custom_call.1} parent=1 // pred_check
      _
    $region3: #{tpu_custom_call.1} parent=1 // pred_check_branch
      %9 = sbr.rel (0) target = $region5
    $region4: #{tpu_custom_call.1} parent=1 // pred_region
      %11 = vsyncadd [#allocation3], 768
      %s12 = sshll.u32 %s0, 4
      %s13 = int_to_ptr.hbm [resolvable:$true] %s12
      %s14 = sshll.u32 [#allocation2], 4
      %s15 = int_to_ptr.vmem [resolvable:$true] %s14
      %20 = dma.hbm_to_vmem [thread:$0]  %s13, 256, %s15, [#allocation3], 256, 256, 16
    $region5: #{tpu_custom_call.1} parent=1 // pred_fallthru
      _
    // Predicated region
    $region6: #{tpu_custom_call.1} parent=1 // pred_check
      _
    $region7: #{tpu_custom_call.1} parent=1 // pred_check_branch
      %22 = sbr.rel (0) target = $region9
    $region8: #{tpu_custom_call.1} parent=1 // pred_region
      %24 = dma.done [#allocation3], 1024
    $region9: #{tpu_custom_call.1} parent=1 // pred_fallthru
      _
    %v25 = vld [vmem:[#allocation2] sm:$0xff]
    %v26 = vld [vmem:[#allocation2 + $0x8] sm:$0xff]
    %v27 = vld [vmem:[#allocation2 + $0x10] sm:$0xff]
    %v28 = vld [vmem:[#allocation2 + $0x18] sm:$0xff]
    %v29 = vld [vmem:[#allocation2 + $0x20] sm:$0xff]
    %v30 = vld [vmem:[#allocation2 + $0x28] sm:$0xff]
    %v31 = vld [vmem:[#allocation2 + $0x30] sm:$0xff]
    %v32 = vld [vmem:[#allocation2 + $0x38] sm:$0xff]
    %v33 = vxor.u32 %v25, 2147483648
    %v34 = vxor.u32 %v26, 2147483648
    %v35 = vxor.u32 %v27, 2147483648
    %v36 = vxor.u32 %v28, 2147483648
    %v37 = vxor.u32 %v29, 2147483648
    %v38 = vxor.u32 %v30, 2147483648
    %v39 = vxor.u32 %v31, 2147483648
    %v40 = vxor.u32 %v32, 2147483648
    %v41 = vmul.f32 %v33, 1.442695
    %v42 = vpow.pop %v41
    %v43 = vmul.f32 %v34, 1.442695
    %v44 = vpow.pop %v43
    %v45 = vmul.f32 %v35, 1.442695
    %v46 = vpow.pop %v45
    %v47 = vmul.f32 %v36, 1.442695
    %v48 = vpow.pop %v47
    %v49 = vmul.f32 %v37, 1.442695
    %v50 = vpow.pop %v49
    %v51 = vmul.f32 %v38, 1.442695
    %v52 = vpow.pop %v51
    %v53 = vmul.f32 %v39, 1.442695
    %v54 = vpow.pop %v53
    %v55 = vmul.f32 %v40, 1.442695
    %v56 = vpow.pop %v55
    %v57 = vadd.f32 %v42, 1.0
    %v58 = vadd.f32 %v44, 1.0
    %v59 = vadd.f32 %v46, 1.0
    %v60 = vadd.f32 %v48, 1.0
    %v61 = vadd.f32 %v50, 1.0
    %v62 = vadd.f32 %v52, 1.0
    %v63 = vadd.f32 %v54, 1.0
    %v64 = vadd.f32 %v56, 1.0
    %v65 = vrcp.pop %v57
    %v66 = vmul.f32 %v57, %v65
    %v67 = vsub.f32 1.0, %v66
    %v68 = vmul.f32 %v65, %v67
    %v69 = vadd.f32 %v65, %v68
    %vm70 = vweird.f32 %v57
    %vm71 = vweird.f32 %v65
    %vm72 = vmor %vm70, %vm71
    %v73 = vsel %vm72, %v65, %v69
    %v74 = vand.u32 2147483647, %v57
    %vm75 = vcmp.eq.f32.partialorder %v74, 8.507059e+37
    %v76 = vand.u32 %v57, 2147483648
    %v77 = vor.u32 1.1754944e-38, %v76
    %v78 = vsel %vm75, %v77, %v73
    %v79 = vmul.f32 1.0, %v78
    %v80 = vrcp.pop %v58
    %v81 = vmul.f32 %v58, %v80
    %v82 = vsub.f32 1.0, %v81
    %v83 = vmul.f32 %v80, %v82
    %v84 = vadd.f32 %v80, %v83
    %vm85 = vweird.f32 %v58
    %vm86 = vweird.f32 %v80
    %vm87 = vmor %vm85, %vm86
    %v88 = vsel %vm87, %v80, %v84
    %v89 = vand.u32 2147483647, %v58
    %vm90 = vcmp.eq.f32.partialorder %v89, 8.507059e+37
    %v91 = vand.u32 %v58, 2147483648
    %v92 = vor.u32 1.1754944e-38, %v91
    %v93 = vsel %vm90, %v92, %v88
    %v94 = vmul.f32 1.0, %v93
    %v95 = vrcp.pop %v59
    %v96 = vmul.f32 %v59, %v95
    %v97 = vsub.f32 1.0, %v96
    %v98 = vmul.f32 %v95, %v97
    %v99 = vadd.f32 %v95, %v98
    %vm100 = vweird.f32 %v59
    %vm101 = vweird.f32 %v95
    %vm102 = vmor %vm100, %vm101
    %v103 = vsel %vm102, %v95, %v99
    %v104 = vand.u32 2147483647, %v59
    %vm105 = vcmp.eq.f32.partialorder %v104, 8.507059e+37
    %v106 = vand.u32 %v59, 2147483648
    %v107 = vor.u32 1.1754944e-38, %v106
    %v108 = vsel %vm105, %v107, %v103
    %v109 = vmul.f32 1.0, %v108
    %v110 = vrcp.pop %v60
    %v111 = vmul.f32 %v60, %v110
    %v112 = vsub.f32 1.0, %v111
    %v113 = vmul.f32 %v110, %v112
    %v114 = vadd.f32 %v110, %v113
    %vm115 = vweird.f32 %v60
    %vm116 = vweird.f32 %v110
    %vm117 = vmor %vm115, %vm116
    %v118 = vsel %vm117, %v110, %v114
    %v119 = vand.u32 2147483647, %v60
    %vm120 = vcmp.eq.f32.partialorder %v119, 8.507059e+37
    %v121 = vand.u32 %v60, 2147483648
    %v122 = vor.u32 1.1754944e-38, %v121
    %v123 = vsel %vm120, %v122, %v118
    %v124 = vmul.f32 1.0, %v123
    %v125 = vrcp.pop %v61
    %v126 = vmul.f32 %v61, %v125
    %v127 = vsub.f32 1.0, %v126
    %v128 = vmul.f32 %v125, %v127
    %v129 = vadd.f32 %v125, %v128
    %vm130 = vweird.f32 %v61
    %vm131 = vweird.f32 %v125
    %vm132 = vmor %vm130, %vm131
    %v133 = vsel %vm132, %v125, %v129
    %v134 = vand.u32 2147483647, %v61
    %vm135 = vcmp.eq.f32.partialorder %v134, 8.507059e+37
    %v136 = vand.u32 %v61, 2147483648
    %v137 = vor.u32 1.1754944e-38, %v136
    %v138 = vsel %vm135, %v137, %v133
    %v139 = vmul.f32 1.0, %v138
    %v140 = vrcp.pop %v62
    %v141 = vmul.f32 %v62, %v140
    %v142 = vsub.f32 1.0, %v141
    %v143 = vmul.f32 %v140, %v142
    %v144 = vadd.f32 %v140, %v143
    %vm145 = vweird.f32 %v62
    %vm146 = vweird.f32 %v140
    %vm147 = vmor %vm145, %vm146
    %v148 = vsel %vm147, %v140, %v144
    %v149 = vand.u32 2147483647, %v62
    %vm150 = vcmp.eq.f32.partialorder %v149, 8.507059e+37
    %v151 = vand.u32 %v62, 2147483648
    %v152 = vor.u32 1.1754944e-38, %v151
    %v153 = vsel %vm150, %v152, %v148
    %v154 = vmul.f32 1.0, %v153
    %v155 = vrcp.pop %v63
    %v156 = vmul.f32 %v63, %v155
    %v157 = vsub.f32 1.0, %v156
    %v158 = vmul.f32 %v155, %v157
    %v159 = vadd.f32 %v155, %v158
    %vm160 = vweird.f32 %v63
    %vm161 = vweird.f32 %v155
    %vm162 = vmor %vm160, %vm161
    %v163 = vsel %vm162, %v155, %v159
    %v164 = vand.u32 2147483647, %v63
    %vm165 = vcmp.eq.f32.partialorder %v164, 8.507059e+37
    %v166 = vand.u32 %v63, 2147483648
    %v167 = vor.u32 1.1754944e-38, %v166
    %v168 = vsel %vm165, %v167, %v163
    %v169 = vmul.f32 1.0, %v168
    %v170 = vrcp.pop %v64
    %v171 = vmul.f32 %v64, %v170
    %v172 = vsub.f32 1.0, %v171
    %v173 = vmul.f32 %v170, %v172
    %v174 = vadd.f32 %v170, %v173
    %vm175 = vweird.f32 %v64
    %vm176 = vweird.f32 %v170
    %vm177 = vmor %vm175, %vm176
    %v178 = vsel %vm177, %v170, %v174
    %v179 = vand.u32 2147483647, %v64
    %vm180 = vcmp.eq.f32.partialorder %v179, 8.507059e+37
    %v181 = vand.u32 %v64, 2147483648
    %v182 = vor.u32 1.1754944e-38, %v181
    %v183 = vsel %vm180, %v182, %v178
    %v184 = vmul.f32 1.0, %v183
    %v185 = vmul.f32 %v25, %v79
    %v186 = vmul.f32 %v26, %v94
    %v187 = vmul.f32 %v27, %v109
    %v188 = vmul.f32 %v28, %v124
    %v189 = vmul.f32 %v29, %v139
    %v190 = vmul.f32 %v30, %v154
    %v191 = vmul.f32 %v31, %v169
    %v192 = vmul.f32 %v32, %v184
    %193 = vst [vmem:[#allocation5] sm:$0xff] %v185
    %194 = vst [vmem:[#allocation5 + $0x8] sm:$0xff] %v186
    %195 = vst [vmem:[#allocation5 + $0x10] sm:$0xff] %v187
    %196 = vst [vmem:[#allocation5 + $0x18] sm:$0xff] %v188
    %197 = vst [vmem:[#allocation5 + $0x20] sm:$0xff] %v189
    %198 = vst [vmem:[#allocation5 + $0x28] sm:$0xff] %v190
    %199 = vst [vmem:[#allocation5 + $0x30] sm:$0xff] %v191
    %200 = vst [vmem:[#allocation5 + $0x38] sm:$0xff] %v192
    // Predicated region
    $region10: #{tpu_custom_call.1} parent=1 // pred_check
      _
    $region11: #{tpu_custom_call.1} parent=1 // pred_check_branch
      %202 = sbr.rel (0) target = $region13
    $region12: #{tpu_custom_call.1} parent=1 // pred_region
      %204 = vsyncadd [#allocation4], 768
      %s205 = sshll.u32 [#allocation5], 4
      %s206 = int_to_ptr.vmem [resolvable:$true] %s205
      %s207 = sshll.u32 %s1, 4
      %s208 = int_to_ptr.hbm [resolvable:$true] %s207
      %213 = dma.vmem_to_hbm [thread:$0]  %s206, 256, %s208, [#allocation4], 256, 256, 16
    $region13: #{tpu_custom_call.1} parent=1 // pred_fallthru
      _
    // Predicated region
    $region14: #{tpu_custom_call.1} parent=1 // pred_check
      _
    $region15: #{tpu_custom_call.1} parent=1 // pred_check_branch
      %215 = sbr.rel (0) target = $region17
    $region16: #{tpu_custom_call.1} parent=1 // pred_region
      %217 = dma.done [#allocation4], 1024
    $region17: #{tpu_custom_call.1} parent=1 // pred_fallthru
      _
    %218 = vsyncpa [#allocation3], 1
    %219 = vsyncpa [#allocation4], 1

</llo_original>
